<compile_context>
chip_gen: v5e
topology: v5e:2x2
jax: 0.10.0
libtpu: 0.0.40
codegen_flags: <defaults>
</compile_context>

<pallas_src>
import functools

import jax
import jax.numpy as jnp
from jax.experimental import pallas as pl
from jax.experimental.pallas import tpu as pltpu

# logical (PyTorch) sizes
IMAGE_SIZE = 100
H_DIM = 200
Z_DIM = 50

# padded (hardware) sizes
IMG_PAD = 128      # image 100 -> 128 lanes
H_PAD = 256        # hidden 200 -> 256 lanes
Z_HALF = 64        # latent 50 -> 64; mu||log_var packed into 2*Z_HALF = 128 lanes


def _round_up(n, m):
    return ((n + m - 1) // m) * m


def vae_kernel(x_ref, eps_ref,
               w1_ref, b1_ref, w23_ref, b23_ref,
               w4_ref, b4_ref, w5_ref, b5_ref,
               xrec_ref, mulv_ref, z_ref):
    # encode: fc1 + relu  (bf16 MXU inputs, f32 accumulation, f32 elementwise)
    h = jnp.dot(x_ref[...], w1_ref[...],
                preferred_element_type=jnp.float32) + b1_ref[...]
    h = jnp.maximum(h, 0.0)

    # fused fc2 || fc3 -> [tb, 128]  (mu in [:, :64], log_var in [:, 64:])
    mulv = jnp.dot(h.astype(jnp.bfloat16), w23_ref[...],
                   preferred_element_type=jnp.float32) + b23_ref[...]
    mu = mulv[:, :Z_HALF]
    log_var = mulv[:, Z_HALF:]

    # reparameterize: z = mu + eps * exp(log_var / 2)
    # padded columns: mu = 0, log_var = 0 -> std = 1, eps = 0 -> z stays 0.
    z = mu + eps_ref[...].astype(jnp.float32) * jnp.exp(log_var * 0.5)
    z_bf16 = z.astype(jnp.bfloat16)

    # decode: fc4 + relu, fc5 + sigmoid
    h2 = jnp.dot(z_bf16, w4_ref[...],
                 preferred_element_type=jnp.float32) + b4_ref[...]
    h2 = jnp.maximum(h2, 0.0)
    logits = jnp.dot(h2.astype(jnp.bfloat16), w5_ref[...],
                     preferred_element_type=jnp.float32) + b5_ref[...]

    # sigmoid = 1 / (1 + exp(-logits)): exp + approx reciprocal both land on EUP
    xrec = pl.reciprocal(1.0 + jnp.exp(-logits), approx=True)

    xrec_ref[...] = xrec.astype(xrec_ref.dtype)
    mulv_ref[...] = mulv.astype(mulv_ref.dtype)
    z_ref[...] = z_bf16          # exactly the z the decoder consumed


def init_params(key):
    """Deterministic init mimicking nn.Linear's U(-1/sqrt(in), 1/sqrt(in)).

    Weights are stored [in_features, out_features] so y = x @ W + b.
    """
    dims = [(IMAGE_SIZE, H_DIM),   # fc1
            (H_DIM, Z_DIM),        # fc2
            (H_DIM, Z_DIM),        # fc3
            (Z_DIM, H_DIM),        # fc4
            (H_DIM, IMAGE_SIZE)]   # fc5
    params = []
    for (fan_in, fan_out) in dims:
        key, kw, kb = jax.random.split(key, 3)
        bound = 1.0 / jnp.sqrt(fan_in)
        w = jax.random.uniform(kw, (fan_in, fan_out), jnp.float32, -bound, bound)
        b = jax.random.uniform(kb, (1, fan_out), jnp.float32, -bound, bound)
        params += [w, b]
    return params


def prepare_params(params):
    """Zero-pad to hardware tiles, fuse fc2||fc3 into 128 lanes, cast weights to bf16."""
    w1, b1, w2, b2, w3, b3, w4, b4, w5, b5 = params
    f32 = jnp.float32

    def pad_w(w, rows, cols):
        return jnp.zeros((rows, cols), f32).at[:w.shape[0], :w.shape[1]].set(w)

    def pad_b(b, cols):
        return jnp.zeros((1, cols), f32).at[:, :b.shape[1]].set(b)

    w1p = pad_w(w1, IMG_PAD, H_PAD).astype(jnp.bfloat16)
    b1p = pad_b(b1, H_PAD)

    # fused encoder head, packed into 128 lanes:
    #   mu      -> columns [0, Z_DIM)
    #   log_var -> columns [Z_HALF, Z_HALF + Z_DIM)
    w23 = jnp.zeros((H_PAD, 2 * Z_HALF), f32)
    w23 = w23.at[:H_DIM, :Z_DIM].set(w2)
    w23 = w23.at[:H_DIM, Z_HALF:Z_HALF + Z_DIM].set(w3)
    w23p = w23.astype(jnp.bfloat16)

    b23 = jnp.zeros((1, 2 * Z_HALF), f32)
    b23 = b23.at[:, :Z_DIM].set(b2)
    b23 = b23.at[:, Z_HALF:Z_HALF + Z_DIM].set(b3)
    b23p = b23

    w4p = pad_w(w4, Z_HALF, H_PAD).astype(jnp.bfloat16)
    b4p = pad_b(b4, H_PAD)
    w5p = pad_w(w5, H_PAD, IMG_PAD).astype(jnp.bfloat16)
    b5p = pad_b(b5, IMG_PAD)
    return (w1p, b1p, w23p, b23p, w4p, b4p, w5p, b5p)


def _choose_tile(B, batch_tile):
    """16-aligned batch tile; small batches split into 2 steps (v7x megacore)."""
    assert batch_tile % 16 == 0, "batch_tile must be a multiple of 16 (bf16 packing)"
    b16 = _round_up(B, 16)
    if b16 <= batch_tile:
        tb = max(16, _round_up(pl.cdiv(b16, 2), 16))
    else:
        tb = batch_tile
    return tb, _round_up(B, tb)


def vae_forward(x, eps, prepared, *, batch_tile=512):
    """x: [B, IMAGE_SIZE] f32, eps: [B, Z_DIM] f32 standard-normal noise."""
    B = x.shape[0]
    tb, Bp = _choose_tile(B, batch_tile)

    # zero-pad batch and feature dims; padding rows/cols compute harmless zeros.
    xp = jnp.zeros((Bp, IMG_PAD), jnp.bfloat16)
    xp = xp.at[:B, :IMAGE_SIZE].set(x.astype(jnp.bfloat16))
    epsp = jnp.zeros((Bp, Z_HALF), jnp.bfloat16)
    epsp = epsp.at[:B, :Z_DIM].set(eps.astype(jnp.bfloat16))

    row = lambda i: (i, 0)     # streamed activation tiles
    fixed = lambda i: (0, 0)   # weights/biases: resident across all grid steps

    out_shapes = (
        jax.ShapeDtypeStruct((Bp, IMG_PAD), jnp.bfloat16),       # x_reconst (padded)
        jax.ShapeDtypeStruct((Bp, 2 * Z_HALF), jnp.bfloat16),    # mu || log_var (packed)
        jax.ShapeDtypeStruct((Bp, Z_HALF), jnp.bfloat16),        # z (padded)
    )
    in_specs = [
        pl.BlockSpec((tb, IMG_PAD), row),            # x
        pl.BlockSpec((tb, Z_HALF), row),             # eps
        pl.BlockSpec((IMG_PAD, H_PAD), fixed),       # w1
        pl.BlockSpec((1, H_PAD), fixed),             # b1
        pl.BlockSpec((H_PAD, 2 * Z_HALF), fixed),    # w23 (fused fc2||fc3)
        pl.BlockSpec((1, 2 * Z_HALF), fixed),        # b23
        pl.BlockSpec((Z_HALF, H_PAD), fixed),        # w4
        pl.BlockSpec((1, H_PAD), fixed),             # b4
        pl.BlockSpec((H_PAD, IMG_PAD), fixed),       # w5
        pl.BlockSpec((1, IMG_PAD), fixed),           # b5
    ]
    out_specs = (
        pl.BlockSpec((tb, IMG_PAD), row),
        pl.BlockSpec((tb, 2 * Z_HALF), row),
        pl.BlockSpec((tb, Z_HALF), row),
    )

    xrec, mulv, z = pl.pallas_call(
        vae_kernel,
        out_shape=out_shapes,
        grid=(Bp // tb,),
        in_specs=in_specs,
        out_specs=out_specs,
        compiler_params=pltpu.CompilerParams(
            dimension_semantics=("parallel",)),   # megacore split on v7x
    )(xp, epsp, *prepared)

    x_reconst = xrec[:B, :IMAGE_SIZE]
    mu = mulv[:B, :Z_DIM]
    log_var = mulv[:B, Z_HALF:Z_HALF + Z_DIM]
    z_out = z[:B, :Z_DIM]
    return x_reconst, mu, log_var, z_out


def vae_reference(x, eps, params):
    """Pure-JAX f32 reference matching the PyTorch module semantics."""
    w1, b1, w2, b2, w3, b3, w4, b4, w5, b5 = params
    h = jax.nn.relu(x @ w1 + b1)
    mu = h @ w2 + b2
    log_var = h @ w3 + b3
    z = mu + eps * jnp.exp(log_var / 2.0)
    h2 = jax.nn.relu(z @ w4 + b4)
    x_reconst = jax.nn.sigmoid(h2 @ w5 + b5)
    return x_reconst, mu, log_var, z


if __name__ == "__main__":
    key = jax.random.PRNGKey(0)
    k_x, k_eps, k_p = jax.random.split(key, 3)

    B = 32
    x = jax.random.uniform(k_x, (B, IMAGE_SIZE), jnp.float32)   # "image" rows
    eps = jax.random.normal(k_eps, (B, Z_DIM), jnp.float32)     # reparam noise
    params = init_params(k_p)
    prepared = prepare_params(params)

    # B=32 with the default batch_tile -> tb=16, 2 grid steps (exercises the
    # streamed-batch pipeline with weights resident in VMEM).
    fwd = jax.jit(functools.partial(vae_forward, batch_tile=512))
    outs = fwd(x, eps, prepared)
    outs = jax.block_until_ready(outs)

    # correctness vs. the pure-JAX f32 reference.  Tolerances cover bf16 MXU
    # inputs, bf16 eps/outputs, and the approximate EUP reciprocal; z gets a
    # looser bound since its magnitude (mu + eps*std) is the largest.
    refs = vae_reference(x, eps, params)
    tols = (3e-2, 3e-2, 3e-2, 8e-2)   # x_reconst, mu, log_var, z
    for o, r, tol in zip(outs, refs, tols):
        assert o.shape == r.shape, (o.shape, r.shape)
        err = jnp.max(jnp.abs(o.astype(jnp.float32) - r))
        assert err < tol, (float(err), tol)

    print("KERNEL_OK")
</pallas_src>

<mosaic_0001>
module attributes {stable_mosaic.version = 11 : i64} {
  func.func @vae_kernel(%arg0: i32, %arg1: memref<16x128xbf16, #tpu.memory_space<vmem>>, %arg2: memref<16x64xbf16, #tpu.memory_space<vmem>>, %arg3: memref<128x256xbf16, #tpu.memory_space<vmem>>, %arg4: memref<1x256xf32, #tpu.memory_space<vmem>>, %arg5: memref<256x128xbf16, #tpu.memory_space<vmem>>, %arg6: memref<1x128xf32, #tpu.memory_space<vmem>>, %arg7: memref<64x256xbf16, #tpu.memory_space<vmem>>, %arg8: memref<1x256xf32, #tpu.memory_space<vmem>>, %arg9: memref<256x128xbf16, #tpu.memory_space<vmem>>, %arg10: memref<1x128xf32, #tpu.memory_space<vmem>>, %arg11: memref<16x128xbf16, #tpu.memory_space<vmem>>, %arg12: memref<16x128xbf16, #tpu.memory_space<vmem>>, %arg13: memref<16x64xbf16, #tpu.memory_space<vmem>>) attributes {dimension_semantics = [#tpu.dimension_semantics<parallel>], iteration_bounds = array<i64: 2>, scalar_prefetch = 0 : i64, scratch_operands = 0 : i64, tpu.core_type = #tpu.core_type<tc>, window_params = [{transform_indices = @transform_0, window_bounds = array<i64: 16, 128>}, {transform_indices = @transform_1, window_bounds = array<i64: 16, 64>}, {pipeline_mode = #tpu.pipeline_mode<synchronous>, transform_indices = @transform_2, window_bounds = array<i64: 128, 256>}, {pipeline_mode = #tpu.pipeline_mode<synchronous>, transform_indices = @transform_3, window_bounds = array<i64: 1, 256>}, {pipeline_mode = #tpu.pipeline_mode<synchronous>, transform_indices = @transform_4, window_bounds = array<i64: 256, 128>}, {pipeline_mode = #tpu.pipeline_mode<synchronous>, transform_indices = @transform_5, window_bounds = array<i64: 1, 128>}, {pipeline_mode = #tpu.pipeline_mode<synchronous>, transform_indices = @transform_6, window_bounds = array<i64: 64, 256>}, {pipeline_mode = #tpu.pipeline_mode<synchronous>, transform_indices = @transform_7, window_bounds = array<i64: 1, 256>}, {pipeline_mode = #tpu.pipeline_mode<synchronous>, transform_indices = @transform_8, window_bounds = array<i64: 256, 128>}, {pipeline_mode = #tpu.pipeline_mode<synchronous>, transform_indices = @transform_9, window_bounds = array<i64: 1, 128>}, {transform_indices = @transform_10, window_bounds = array<i64: 16, 128>}, {transform_indices = @transform_11, window_bounds = array<i64: 16, 128>}, {transform_indices = @transform_12, window_bounds = array<i64: 16, 64>}]} {
    %c0 = arith.constant 0 : index
    %c0_0 = arith.constant 0 : index
    %0 = vector.load %arg1[%c0, %c0_0] : memref<16x128xbf16, #tpu.memory_space<vmem>>, vector<16x128xbf16>
    %c0_1 = arith.constant 0 : index
    %c0_2 = arith.constant 0 : index
    %1 = vector.load %arg3[%c0_1, %c0_2] : memref<128x256xbf16, #tpu.memory_space<vmem>>, vector<128x256xbf16>
    %cst = arith.constant dense<0.000000e+00> : vector<16x256xf32>
    %2 = tpu.matmul %0, %1, %cst {dimension_numbers = #tpu.dot_dimension_numbers<[1], [0], [0], [1], [0, 0, 1, 1], [], []>} : vector<16x128xbf16>, vector<128x256xbf16>, vector<16x256xf32> -> vector<16x256xf32>
    %c0_3 = arith.constant 0 : index
    %c0_4 = arith.constant 0 : index
    %3 = vector.load %arg4[%c0_3, %c0_4] : memref<1x256xf32, #tpu.memory_space<vmem>>, vector<1x256xf32>
    %4 = vector.broadcast %3 : vector<1x256xf32> to vector<16x256xf32>
    %5 = arith.addf %2, %4 : vector<16x256xf32>
    %cst_5 = arith.constant 0.000000e+00 : f32
    %6 = vector.broadcast %cst_5 : f32 to vector<16x256xf32>
    %7 = arith.maximumf %5, %6 : vector<16x256xf32>
    %8 = arith.truncf %7 : vector<16x256xf32> to vector<16x256xbf16>
    %c0_6 = arith.constant 0 : index
    %c0_7 = arith.constant 0 : index
    %9 = vector.load %arg5[%c0_6, %c0_7] : memref<256x128xbf16, #tpu.memory_space<vmem>>, vector<256x128xbf16>
    %cst_8 = arith.constant dense<0.000000e+00> : vector<16x128xf32>
    %10 = tpu.matmul %8, %9, %cst_8 {dimension_numbers = #tpu.dot_dimension_numbers<[1], [0], [0], [1], [0, 0, 1, 1], [], []>} : vector<16x256xbf16>, vector<256x128xbf16>, vector<16x128xf32> -> vector<16x128xf32>
    %c0_9 = arith.constant 0 : index
    %c0_10 = arith.constant 0 : index
    %11 = vector.load %arg6[%c0_9, %c0_10] : memref<1x128xf32, #tpu.memory_space<vmem>>, vector<1x128xf32>
    %12 = vector.broadcast %11 : vector<1x128xf32> to vector<16x128xf32>
    %13 = arith.addf %10, %12 : vector<16x128xf32>
    %14 = vector.extract_strided_slice %13 {offsets = [0, 0], sizes = [16, 64], strides = [1, 1]} : vector<16x128xf32> to vector<16x64xf32>
    %15 = vector.extract_strided_slice %13 {offsets = [0, 64], sizes = [16, 64], strides = [1, 1]} : vector<16x128xf32> to vector<16x64xf32>
    %c0_11 = arith.constant 0 : index
    %c0_12 = arith.constant 0 : index
    %16 = vector.load %arg2[%c0_11, %c0_12] : memref<16x64xbf16, #tpu.memory_space<vmem>>, vector<16x64xbf16>
    %17 = arith.extf %16 : vector<16x64xbf16> to vector<16x64xf32>
    %cst_13 = arith.constant 5.000000e-01 : f32
    %18 = vector.broadcast %cst_13 : f32 to vector<16x64xf32>
    %19 = arith.mulf %15, %18 : vector<16x64xf32>
    %20 = math.exp %19 : vector<16x64xf32>
    %21 = arith.mulf %17, %20 : vector<16x64xf32>
    %22 = arith.addf %14, %21 : vector<16x64xf32>
    %23 = arith.truncf %22 : vector<16x64xf32> to vector<16x64xbf16>
    %c0_14 = arith.constant 0 : index
    %c0_15 = arith.constant 0 : index
    %24 = vector.load %arg7[%c0_14, %c0_15] : memref<64x256xbf16, #tpu.memory_space<vmem>>, vector<64x256xbf16>
    %cst_16 = arith.constant dense<0.000000e+00> : vector<16x256xf32>
    %25 = tpu.matmul %23, %24, %cst_16 {dimension_numbers = #tpu.dot_dimension_numbers<[1], [0], [0], [1], [0, 0, 1, 1], [], []>} : vector<16x64xbf16>, vector<64x256xbf16>, vector<16x256xf32> -> vector<16x256xf32>
    %c0_17 = arith.constant 0 : index
    %c0_18 = arith.constant 0 : index
    %26 = vector.load %arg8[%c0_17, %c0_18] : memref<1x256xf32, #tpu.memory_space<vmem>>, vector<1x256xf32>
    %27 = vector.broadcast %26 : vector<1x256xf32> to vector<16x256xf32>
    %28 = arith.addf %25, %27 : vector<16x256xf32>
    %cst_19 = arith.constant 0.000000e+00 : f32
    %29 = vector.broadcast %cst_19 : f32 to vector<16x256xf32>
    %30 = arith.maximumf %28, %29 : vector<16x256xf32>
    %31 = arith.truncf %30 : vector<16x256xf32> to vector<16x256xbf16>
    %c0_20 = arith.constant 0 : index
    %c0_21 = arith.constant 0 : index
    %32 = vector.load %arg9[%c0_20, %c0_21] : memref<256x128xbf16, #tpu.memory_space<vmem>>, vector<256x128xbf16>
    %cst_22 = arith.constant dense<0.000000e+00> : vector<16x128xf32>
    %33 = tpu.matmul %31, %32, %cst_22 {dimension_numbers = #tpu.dot_dimension_numbers<[1], [0], [0], [1], [0, 0, 1, 1], [], []>} : vector<16x256xbf16>, vector<256x128xbf16>, vector<16x128xf32> -> vector<16x128xf32>
    %c0_23 = arith.constant 0 : index
    %c0_24 = arith.constant 0 : index
    %34 = vector.load %arg10[%c0_23, %c0_24] : memref<1x128xf32, #tpu.memory_space<vmem>>, vector<1x128xf32>
    %35 = vector.broadcast %34 : vector<1x128xf32> to vector<16x128xf32>
    %36 = arith.addf %33, %35 : vector<16x128xf32>
    %cst_25 = arith.constant 0.000000e+00 : f32
    %37 = vector.broadcast %cst_25 : f32 to vector<16x128xf32>
    %38 = arith.subf %37, %36 : vector<16x128xf32>
    %39 = math.exp %38 : vector<16x128xf32>
    %cst_26 = arith.constant 1.000000e+00 : f32
    %40 = vector.broadcast %cst_26 : f32 to vector<16x128xf32>
    %41 = arith.addf %40, %39 : vector<16x128xf32>
    %42 = tpu.reciprocal %41 {approx = true} : vector<16x128xf32> -> vector<16x128xf32>
    %43 = arith.truncf %42 : vector<16x128xf32> to vector<16x128xbf16>
    %c0_27 = arith.constant 0 : index
    %c0_28 = arith.constant 0 : index
    %44 = vector.load %arg11[%c0_27, %c0_28] : memref<16x128xbf16, #tpu.memory_space<vmem>>, vector<16x128xbf16>
    tpu.vector_store %arg11[%c0_27, %c0_28], %43 {strides = array<i32>} : memref<16x128xbf16, #tpu.memory_space<vmem>>, vector<16x128xbf16>,
    %45 = arith.truncf %13 : vector<16x128xf32> to vector<16x128xbf16>
    %c0_29 = arith.constant 0 : index
    %c0_30 = arith.constant 0 : index
    %46 = vector.load %arg12[%c0_29, %c0_30] : memref<16x128xbf16, #tpu.memory_space<vmem>>, vector<16x128xbf16>
    tpu.vector_store %arg12[%c0_29, %c0_30], %45 {strides = array<i32>} : memref<16x128xbf16, #tpu.memory_space<vmem>>, vector<16x128xbf16>,
    %c0_31 = arith.constant 0 : index
    %c0_32 = arith.constant 0 : index
    %47 = vector.load %arg13[%c0_31, %c0_32] : memref<16x64xbf16, #tpu.memory_space<vmem>>, vector<16x64xbf16>
    tpu.vector_store %arg13[%c0_31, %c0_32], %23 {strides = array<i32>} : memref<16x64xbf16, #tpu.memory_space<vmem>>, vector<16x64xbf16>,
    return
  }
  func.func @transform_0(%arg0: i32) -> (i32, i32) {
    %c0_i32 = arith.constant 0 : i32
    %c0_i32_0 = arith.constant 0 : i32
    return %arg0, %c0_i32 : i32, i32
  }
  func.func @transform_1(%arg0: i32) -> (i32, i32) {
    %c0_i32 = arith.constant 0 : i32
    %c0_i32_0 = arith.constant 0 : i32
    return %arg0, %c0_i32 : i32, i32
  }
  func.func @transform_2(%arg0: i32) -> (i32, i32) {
    %c0_i32 = arith.constant 0 : i32
    %c0_i32_0 = arith.constant 0 : i32
    %c0_i32_1 = arith.constant 0 : i32
    return %c0_i32, %c0_i32_0 : i32, i32
  }
  func.func @transform_3(%arg0: i32) -> (i32, i32) {
    %c0_i32 = arith.constant 0 : i32
    %c0_i32_0 = arith.constant 0 : i32
    %c0_i32_1 = arith.constant 0 : i32
    return %c0_i32, %c0_i32_0 : i32, i32
  }
  func.func @transform_4(%arg0: i32) -> (i32, i32) {
    %c0_i32 = arith.constant 0 : i32
    %c0_i32_0 = arith.constant 0 : i32
    %c0_i32_1 = arith.constant 0 : i32
    return %c0_i32, %c0_i32_0 : i32, i32
  }
  func.func @transform_5(%arg0: i32) -> (i32, i32) {
    %c0_i32 = arith.constant 0 : i32
    %c0_i32_0 = arith.constant 0 : i32
    %c0_i32_1 = arith.constant 0 : i32
    return %c0_i32, %c0_i32_0 : i32, i32
  }
  func.func @transform_6(%arg0: i32) -> (i32, i32) {
    %c0_i32 = arith.constant 0 : i32
    %c0_i32_0 = arith.constant 0 : i32
    %c0_i32_1 = arith.constant 0 : i32
    return %c0_i32, %c0_i32_0 : i32, i32
  }
  func.func @transform_7(%arg0: i32) -> (i32, i32) {
    %c0_i32 = arith.constant 0 : i32
    %c0_i32_0 = arith.constant 0 : i32
    %c0_i32_1 = arith.constant 0 : i32
    return %c0_i32, %c0_i32_0 : i32, i32
  }
  func.func @transform_8(%arg0: i32) -> (i32, i32) {
    %c0_i32 = arith.constant 0 : i32
    %c0_i32_0 = arith.constant 0 : i32
    %c0_i32_1 = arith.constant 0 : i32
    return %c0_i32, %c0_i32_0 : i32, i32
  }
  func.func @transform_9(%arg0: i32) -> (i32, i32) {
    %c0_i32 = arith.constant 0 : i32
    %c0_i32_0 = arith.constant 0 : i32
    %c0_i32_1 = arith.constant 0 : i32
    return %c0_i32, %c0_i32_0 : i32, i32
  }
  func.func @transform_10(%arg0: i32) -> (i32, i32) {
    %c0_i32 = arith.constant 0 : i32
    %c0_i32_0 = arith.constant 0 : i32
    return %arg0, %c0_i32 : i32, i32
  }
  func.func @transform_11(%arg0: i32) -> (i32, i32) {
    %c0_i32 = arith.constant 0 : i32
    %c0_i32_0 = arith.constant 0 : i32
    return %arg0, %c0_i32 : i32, i32
  }
  func.func @transform_12(%arg0: i32) -> (i32, i32) {
    %c0_i32 = arith.constant 0 : i32
    %c0_i32_0 = arith.constant 0 : i32
    return %arg0, %c0_i32 : i32, i32
  }
}

</mosaic_0001>

<llo_original>
// kernel: vae_forward.1
$region0: #{vae_forward.1}
  #allocation0 [shape = 'u32[]', space=smem, size = 0x4, offset = 0x4, fixed_abs, tag = 'smem constant byte address 0x4 - core index']
  #allocation1 [shape = 'u32[72,128]{1,0:T(1,128)}', space=vmem, size = 0x9000, scoped, tag = 'internal scratch']
  %s0 = inlined_call_operand.vmem [shape: bf16[32,128], index: 0, kind: input, shape index: {}]
  %s1 = inlined_call_operand.vmem [shape: bf16[32,64], index: 1, kind: input, shape index: {}]
  %s2 = inlined_call_operand.vmem [shape: bf16[128,256], index: 2, kind: input, shape index: {}]
  %s3 = inlined_call_operand.vmem [shape: f32[1,256], index: 3, kind: input, shape index: {}]
  %s4 = inlined_call_operand.hbm [shape: bf16[256,128], index: 4, kind: input, shape index: {}]
  %s5 = inlined_call_operand.vmem [shape: f32[1,128], index: 5, kind: input, shape index: {}]
  %s6 = inlined_call_operand.hbm [shape: bf16[64,256], index: 6, kind: input, shape index: {}]
  %s7 = inlined_call_operand.vmem [shape: f32[1,256], index: 7, kind: input, shape index: {}]
  %s8 = inlined_call_operand.hbm [shape: bf16[256,128], index: 8, kind: input, shape index: {}]
  %s9 = inlined_call_operand.vmem [shape: f32[1,128], index: 9, kind: input, shape index: {}]
  %s10 = inlined_call_operand.hbm [shape: bf16[32,128], index: 10, kind: output, shape index: {0}]
  %s11 = inlined_call_operand.vmem [shape: bf16[32,128], index: 11, kind: output, shape index: {1}]
  %s12 = inlined_call_operand.hbm [shape: bf16[32,64], index: 12, kind: output, shape index: {2}]
  %13 = xla_tuple %s10, %s11, %s12
  %s14 = sld [smem:[#allocation0]]
  $region101: #{vae_forward.1} parent=0
    _
  %s16 = ssub.s32 1, %s14
  %s17 = scalar_select 0, %s16, %s14
  $region1: #{vae_forward.1} parent=0
    #allocation2 [shape = 'u8[65536]{0}', space=vmem, size = 0x10000, scoped, tag = 'input window, operand 4, single buffered']
    #allocation3 [shape = 's32[2]{0}', space=sflag, size = 0x8, scoped, tag = 'scoped memory for vae_forward.1']
    #allocation4 [shape = 's32[2]{0}', space=sflag, size = 0x8, scoped, tag = 'scoped memory for vae_forward.1']
    #allocation5 [shape = 'u8[32768]{0}', space=vmem, size = 0x8000, scoped, tag = 'input window, operand 6, single buffered']
    #allocation6 [shape = 's32[1]{0}', space=sflag, size = 0x4, scoped, tag = 'scoped memory for vae_forward.1']
    #allocation7 [shape = 'u8[65536]{0}', space=vmem, size = 0x10000, scoped, tag = 'input window, operand 8, single buffered']
    #allocation8 [shape = 'u8[8192]{0}', space=vmem, size = 0x2000, scoped, tag = 'output window, operand 0']
    #allocation9 [shape = 'u8[8192]{0}', space=vmem, size = 0x2000, scoped, tag = 'output window, operand 2']
    #allocation10 [shape = 's32[2]{0}', space=sflag, size = 0x8, scoped, tag = 'scoped memory for vae_forward.1']
    %18 = vsyncpa [#allocation3], 0
    %19 = vsyncpa [#allocation6], 0
    %20 = vsyncpa [#allocation4], 0
    %s21 = scalar_lea.sflag [#allocation4], 1
    %22 = vsyncpa %s21, 0
    %23 = vsyncpa [#allocation10], 0
    %s24 = scalar_lea.sflag [#allocation10], 1
    %25 = vsyncpa %s24, 0
    loop: start=0, step=1, limit=4
    $region2: #{vae_forward.1} parent=1 // loop_pre_header
      _
    $region3: #{vae_forward.1} parent=1 // loop_header
      %s27 = sphi 0, %s31
      %p28 = scmp.ge.s32.totalorder %s27, 4
      %s37 = sphi 0, %s39
      %s40 = sphi 0, %s37
      %s41 = sphi 0, %s40
      %s57 = sphi 0, %s41
      %s63 = sphi 0, %s65
      %s66 = sphi 0, %s63
      %s67 = sphi 0, %s66
      %s83 = sphi 0, %s67
      %s87 = sphi 0, %s87
      %s89 = sphi 0, %s87
      %s90 = sphi 0, %s89
      %s104 = sphi 0, %s90
      %s108 = sphi 0, %s108
      %s110 = sphi 0, %s108
      %s111 = sphi 0, %s110
      %s125 = sphi 0, %s111
      %s129 = sphi 0, %s129
      %s131 = sphi 0, %s129
      %s132 = sphi 0, %s131
      %s146 = sphi 0, %s132
      %s150 = sphi 0, %s150
      %s152 = sphi 0, %s150
      %s153 = sphi 0, %s152
      %s167 = sphi 0, %s153
      %s171 = sphi 0, %s171
      %s173 = sphi 0, %s171
      %s174 = sphi 0, %s173
      %s188 = sphi 0, %s174
      %s192 = sphi 0, %s192
      %s194 = sphi 0, %s192
      %s195 = sphi 0, %s194
      %s209 = sphi 0, %s195
      %s213 = sphi 0, %s213
      %s215 = sphi 0, %s213
      %s216 = sphi 0, %s215
      %s230 = sphi 0, %s216
      %s234 = sphi 0, %s234
      %s236 = sphi 0, %s234
      %s237 = sphi 0, %s236
      %s251 = sphi 0, %s237
      %s257 = sphi 0, %s259
      %s260 = sphi 0, %s257
      %s261 = sphi 0, %s260
      %s277 = sphi 0, %s261
      %s283 = sphi 0, %s285
      %s286 = sphi 0, %s283
      %s287 = sphi 0, %s286
      %s303 = sphi 0, %s287
      %s309 = sphi 0, %s311
      %s312 = sphi 0, %s309
      %s313 = sphi 0, %s312
      %s329 = sphi 0, %s313
    $region4: #{vae_forward.1} parent=1 // loop_header_branch
      %30 = sbr.rel (%p28) target = $region8
    $region5: #{vae_forward.1} parent=1 // loop_body
      %s32 = ssub.s32 %s27, 1
      %s33 = ssub.s32 %s27, 2
      %s34 = sadd.s32 %s27, 1
      %s35 = ssub.s32 %s27, %s34
      %p36 = scmp.eq.s32.totalorder %s35, 0
      %s38 = sadd.s32 %s37, 1
      %s39 = scalar_select %p36, %s37, %s38
      %p42 = pneg %p36
      %p43 = scmp.eq.s32.totalorder %s27, 1
      %p44 = por %p42, %p43
      %p45 = scmp.ne.s32.totalorder %s37, %s40
      %p46 = scmp.eq.s32.totalorder %s27, 0
      %p47 = por %p45, %p46
      %p48 = scmp.ne.s32.totalorder %s37, %s40
      %p49 = scmp.eq.s32.totalorder %s32, 1
      %p50 = por %p48, %p49
      %p51 = scmp.ne.s32.totalorder %s40, %s41
      %p52 = scmp.eq.s32.totalorder %s32, 0
      %p53 = por %p51, %p52
      %p54 = scmp.ne.s32.totalorder %s40, %s41
      %p55 = scmp.eq.s32.totalorder %s33, 1
      %p56 = por %p54, %p55
      %p58 = scmp.ne.s32.totalorder %s41, %s57
      %p59 = scmp.eq.s32.totalorder %s33, 0
      %p60 = por %p58, %p59
      %s61 = ssub.s32 %s27, %s34
      %p62 = scmp.eq.s32.totalorder %s61, 0
      %s64 = sadd.s32 %s63, 1
      %s65 = scalar_select %p62, %s63, %s64
      %p68 = pneg %p62
      %p69 = scmp.eq.s32.totalorder %s27, 1
      %p70 = por %p68, %p69
      %p71 = scmp.ne.s32.totalorder %s63, %s66
      %p72 = scmp.eq.s32.totalorder %s27, 0
      %p73 = por %p71, %p72
      %p74 = scmp.ne.s32.totalorder %s63, %s66
      %p75 = scmp.eq.s32.totalorder %s32, 1
      %p76 = por %p74, %p75
      %p77 = scmp.ne.s32.totalorder %s66, %s67
      %p78 = scmp.eq.s32.totalorder %s32, 0
      %p79 = por %p77, %p78
      %p80 = scmp.ne.s32.totalorder %s66, %s67
      %p81 = scmp.eq.s32.totalorder %s33, 1
      %p82 = por %p80, %p81
      %p84 = scmp.ne.s32.totalorder %s67, %s83
      %p85 = scmp.eq.s32.totalorder %s33, 0
      %p86 = por %p84, %p85
      %s88 = sadd.s32 %s87, 1
      %p91 = scmp.eq.s32.totalorder %s27, 1
      %p92 = scmp.ne.s32.totalorder %s87, %s89
      %p93 = scmp.eq.s32.totalorder %s27, 0
      %p94 = por %p92, %p93
      %p95 = scmp.ne.s32.totalorder %s87, %s89
      %p96 = scmp.eq.s32.totalorder %s32, 1
      %p97 = por %p95, %p96
      %p98 = scmp.ne.s32.totalorder %s89, %s90
      %p99 = scmp.eq.s32.totalorder %s32, 0
      %p100 = por %p98, %p99
      %p101 = scmp.ne.s32.totalorder %s89, %s90
      %p102 = scmp.eq.s32.totalorder %s33, 1
      %p103 = por %p101, %p102
      %p105 = scmp.ne.s32.totalorder %s90, %s104
      %p106 = scmp.eq.s32.totalorder %s33, 0
      %p107 = por %p105, %p106
      %s109 = sadd.s32 %s108, 1
      %p112 = scmp.eq.s32.totalorder %s27, 1
      %p113 = scmp.ne.s32.totalorder %s108, %s110
      %p114 = scmp.eq.s32.totalorder %s27, 0
      %p115 = por %p113, %p114
      %p116 = scmp.ne.s32.totalorder %s108, %s110
      %p117 = scmp.eq.s32.totalorder %s32, 1
      %p118 = por %p116, %p117
      %p119 = scmp.ne.s32.totalorder %s110, %s111
      %p120 = scmp.eq.s32.totalorder %s32, 0
      %p121 = por %p119, %p120
      %p122 = scmp.ne.s32.totalorder %s110, %s111
      %p123 = scmp.eq.s32.totalorder %s33, 1
      %p124 = por %p122, %p123
      %p126 = scmp.ne.s32.totalorder %s111, %s125
      %p127 = scmp.eq.s32.totalorder %s33, 0
      %p128 = por %p126, %p127
      %s130 = sadd.s32 %s129, 1
      %p133 = scmp.eq.s32.totalorder %s27, 1
      %p134 = scmp.ne.s32.totalorder %s129, %s131
      %p135 = scmp.eq.s32.totalorder %s27, 0
      %p136 = por %p134, %p135
      %p137 = scmp.ne.s32.totalorder %s129, %s131
      %p138 = scmp.eq.s32.totalorder %s32, 1
      %p139 = por %p137, %p138
      %p140 = scmp.ne.s32.totalorder %s131, %s132
      %p141 = scmp.eq.s32.totalorder %s32, 0
      %p142 = por %p140, %p141
      %p143 = scmp.ne.s32.totalorder %s131, %s132
      %p144 = scmp.eq.s32.totalorder %s33, 1
      %p145 = por %p143, %p144
      %p147 = scmp.ne.s32.totalorder %s132, %s146
      %p148 = scmp.eq.s32.totalorder %s33, 0
      %p149 = por %p147, %p148
      %s151 = sadd.s32 %s150, 1
      %p154 = scmp.eq.s32.totalorder %s27, 1
      %p155 = scmp.ne.s32.totalorder %s150, %s152
      %p156 = scmp.eq.s32.totalorder %s27, 0
      %p157 = por %p155, %p156
      %p158 = scmp.ne.s32.totalorder %s150, %s152
      %p159 = scmp.eq.s32.totalorder %s32, 1
      %p160 = por %p158, %p159
      %p161 = scmp.ne.s32.totalorder %s152, %s153
      %p162 = scmp.eq.s32.totalorder %s32, 0
      %p163 = por %p161, %p162
      %p164 = scmp.ne.s32.totalorder %s152, %s153
      %p165 = scmp.eq.s32.totalorder %s33, 1
      %p166 = por %p164, %p165
      %p168 = scmp.ne.s32.totalorder %s153, %s167
      %p169 = scmp.eq.s32.totalorder %s33, 0
      %p170 = por %p168, %p169
      %s172 = sadd.s32 %s171, 1
      %p175 = scmp.eq.s32.totalorder %s27, 1
      %p176 = scmp.ne.s32.totalorder %s171, %s173
      %p177 = scmp.eq.s32.totalorder %s27, 0
      %p178 = por %p176, %p177
      %p179 = scmp.ne.s32.totalorder %s171, %s173
      %p180 = scmp.eq.s32.totalorder %s32, 1
      %p181 = por %p179, %p180
      %p182 = scmp.ne.s32.totalorder %s173, %s174
      %p183 = scmp.eq.s32.totalorder %s32, 0
      %p184 = por %p182, %p183
      %p185 = scmp.ne.s32.totalorder %s173, %s174
      %p186 = scmp.eq.s32.totalorder %s33, 1
      %p187 = por %p185, %p186
      %p189 = scmp.ne.s32.totalorder %s174, %s188
      %p190 = scmp.eq.s32.totalorder %s33, 0
      %p191 = por %p189, %p190
      %s193 = sadd.s32 %s192, 1
      %p196 = scmp.eq.s32.totalorder %s27, 1
      %p197 = scmp.ne.s32.totalorder %s192, %s194
      %p198 = scmp.eq.s32.totalorder %s27, 0
      %p199 = por %p197, %p198
      %p200 = scmp.ne.s32.totalorder %s192, %s194
      %p201 = scmp.eq.s32.totalorder %s32, 1
      %p202 = por %p200, %p201
      %p203 = scmp.ne.s32.totalorder %s194, %s195
      %p204 = scmp.eq.s32.totalorder %s32, 0
      %p205 = por %p203, %p204
      %p206 = scmp.ne.s32.totalorder %s194, %s195
      %p207 = scmp.eq.s32.totalorder %s33, 1
      %p208 = por %p206, %p207
      %p210 = scmp.ne.s32.totalorder %s195, %s209
      %p211 = scmp.eq.s32.totalorder %s33, 0
      %p212 = por %p210, %p211
      %s214 = sadd.s32 %s213, 1
      %p217 = scmp.eq.s32.totalorder %s27, 1
      %p218 = scmp.ne.s32.totalorder %s213, %s215
      %p219 = scmp.eq.s32.totalorder %s27, 0
      %p220 = por %p218, %p219
      %p221 = scmp.ne.s32.totalorder %s213, %s215
      %p222 = scmp.eq.s32.totalorder %s32, 1
      %p223 = por %p221, %p222
      %p224 = scmp.ne.s32.totalorder %s215, %s216
      %p225 = scmp.eq.s32.totalorder %s32, 0
      %p226 = por %p224, %p225
      %p227 = scmp.ne.s32.totalorder %s215, %s216
      %p228 = scmp.eq.s32.totalorder %s33, 1
      %p229 = por %p227, %p228
      %p231 = scmp.ne.s32.totalorder %s216, %s230
      %p232 = scmp.eq.s32.totalorder %s33, 0
      %p233 = por %p231, %p232
      %s235 = sadd.s32 %s234, 1
      %p238 = scmp.eq.s32.totalorder %s27, 1
      %p239 = scmp.ne.s32.totalorder %s234, %s236
      %p240 = scmp.eq.s32.totalorder %s27, 0
      %p241 = por %p239, %p240
      %p242 = scmp.ne.s32.totalorder %s234, %s236
      %p243 = scmp.eq.s32.totalorder %s32, 1
      %p244 = por %p242, %p243
      %p245 = scmp.ne.s32.totalorder %s236, %s237
      %p246 = scmp.eq.s32.totalorder %s32, 0
      %p247 = por %p245, %p246
      %p248 = scmp.ne.s32.totalorder %s236, %s237
      %p249 = scmp.eq.s32.totalorder %s33, 1
      %p250 = por %p248, %p249
      %p252 = scmp.ne.s32.totalorder %s237, %s251
      %p253 = scmp.eq.s32.totalorder %s33, 0
      %p254 = por %p252, %p253
      %s255 = ssub.s32 %s27, %s34
      %p256 = scmp.eq.s32.totalorder %s255, 0
      %s258 = sadd.s32 %s257, 1
      %s259 = scalar_select %p256, %s257, %s258
      %p262 = pneg %p256
      %p263 = scmp.eq.s32.totalorder %s27, 1
      %p264 = por %p262, %p263
      %p265 = scmp.ne.s32.totalorder %s257, %s260
      %p266 = scmp.eq.s32.totalorder %s27, 0
      %p267 = por %p265, %p266
      %p268 = scmp.ne.s32.totalorder %s257, %s260
      %p269 = scmp.eq.s32.totalorder %s32, 1
      %p270 = por %p268, %p269
      %p271 = scmp.ne.s32.totalorder %s260, %s261
      %p272 = scmp.eq.s32.totalorder %s32, 0
      %p273 = por %p271, %p272
      %p274 = scmp.ne.s32.totalorder %s260, %s261
      %p275 = scmp.eq.s32.totalorder %s33, 1
      %p276 = por %p274, %p275
      %p278 = scmp.ne.s32.totalorder %s261, %s277
      %p279 = scmp.eq.s32.totalorder %s33, 0
      %p280 = por %p278, %p279
      %s281 = ssub.s32 %s27, %s34
      %p282 = scmp.eq.s32.totalorder %s281, 0
      %s284 = sadd.s32 %s283, 1
      %s285 = scalar_select %p282, %s283, %s284
      %p288 = pneg %p282
      %p289 = scmp.eq.s32.totalorder %s27, 1
      %p290 = por %p288, %p289
      %p291 = scmp.ne.s32.totalorder %s283, %s286
      %p292 = scmp.eq.s32.totalorder %s27, 0
      %p293 = por %p291, %p292
      %p294 = scmp.ne.s32.totalorder %s283, %s286
      %p295 = scmp.eq.s32.totalorder %s32, 1
      %p296 = por %p294, %p295
      %p297 = scmp.ne.s32.totalorder %s286, %s287
      %p298 = scmp.eq.s32.totalorder %s32, 0
      %p299 = por %p297, %p298
      %p300 = scmp.ne.s32.totalorder %s286, %s287
      %p301 = scmp.eq.s32.totalorder %s33, 1
      %p302 = por %p300, %p301
      %p304 = scmp.ne.s32.totalorder %s287, %s303
      %p305 = scmp.eq.s32.totalorder %s33, 0
      %p306 = por %p304, %p305
      %s307 = ssub.s32 %s27, %s34
      %p308 = scmp.eq.s32.totalorder %s307, 0
      %s310 = sadd.s32 %s309, 1
      %s311 = scalar_select %p308, %s309, %s310
      %p314 = pneg %p308
      %p315 = scmp.eq.s32.totalorder %s27, 1
      %p316 = por %p314, %p315
      %p317 = scmp.ne.s32.totalorder %s309, %s312
      %p318 = scmp.eq.s32.totalorder %s27, 0
      %p319 = por %p317, %p318
      %p320 = scmp.ne.s32.totalorder %s309, %s312
      %p321 = scmp.eq.s32.totalorder %s32, 1
      %p322 = por %p320, %p321
      %p323 = scmp.ne.s32.totalorder %s312, %s313
      %p324 = scmp.eq.s32.totalorder %s32, 0
      %p325 = por %p323, %p324
      %p326 = scmp.ne.s32.totalorder %s312, %s313
      %p327 = scmp.eq.s32.totalorder %s33, 1
      %p328 = por %p326, %p327
      %p330 = scmp.ne.s32.totalorder %s313, %s329
      %p331 = scmp.eq.s32.totalorder %s33, 0
      %p332 = por %p330, %p331
      %p333 = scmp.le.s32.totalorder 1, %s27
      %p334 = scmp.lt.s32.totalorder %s27, 3
      %p335 = pnand %p333, %p334
      %p336 = pneg %p335
      // Predicated region
      $region9: #{vae_forward.1} parent=5 // pred_check
        _
      $region10: #{vae_forward.1} parent=5 // pred_check_branch
        %338 = sbr.rel (%p335) target = $region12
      $region11: #{vae_forward.1} parent=5 // pred_region
        %s339 = ssub.s32 %s27, 1
        // Predicated region
        $region13: #{vae_forward.1} parent=11 // pred_check
          %p340 = pneg %p100
        $region14: #{vae_forward.1} parent=11 // pred_check_branch
          %342 = sbr.rel (%p340) target = $region16
        $region15: #{vae_forward.1} parent=11 // pred_region
          _
        $region16: #{vae_forward.1} parent=11 // pred_fallthru
          _
        // Predicated region
        $region17: #{vae_forward.1} parent=11 // pred_check
          %p343 = pneg %p121
        $region18: #{vae_forward.1} parent=11 // pred_check_branch
          %345 = sbr.rel (%p343) target = $region20
        $region19: #{vae_forward.1} parent=11 // pred_region
          _
        $region20: #{vae_forward.1} parent=11 // pred_fallthru
          _
        // Predicated region
        $region21: #{vae_forward.1} parent=11 // pred_check
          %p346 = pneg %p142
        $region22: #{vae_forward.1} parent=11 // pred_check_branch
          %348 = sbr.rel (%p346) target = $region24
        $region23: #{vae_forward.1} parent=11 // pred_region
          %350 = vsyncadd [#allocation3], 0
          %s351 = sshll.u32 %s4, 4
          %s352 = int_to_ptr.hbm [resolvable:$true] %s351
          %s353 = sshll.u32 [#allocation2], 4
          %s354 = int_to_ptr.vmem [resolvable:$true] %s353
          %359 = dma.hbm_to_vmem [thread:$0]  %s352, 2048, %s354, [#allocation3], 64, 64, 4
        $region24: #{vae_forward.1} parent=11 // pred_fallthru
          _
        // Predicated region
        $region25: #{vae_forward.1} parent=11 // pred_check
          %p360 = pneg %p163
        $region26: #{vae_forward.1} parent=11 // pred_check_branch
          %362 = sbr.rel (%p360) target = $region28
        $region27: #{vae_forward.1} parent=11 // pred_region
          _
        $region28: #{vae_forward.1} parent=11 // pred_fallthru
          _
        // Predicated region
        $region29: #{vae_forward.1} parent=11 // pred_check
          %p363 = pneg %p184
        $region30: #{vae_forward.1} parent=11 // pred_check_branch
          %365 = sbr.rel (%p363) target = $region32
        $region31: #{vae_forward.1} parent=11 // pred_region
          %367 = vsyncadd [#allocation6], 0
          %s368 = sshll.u32 %s6, 4
          %s369 = int_to_ptr.hbm [resolvable:$true] %s368
          %s370 = sshll.u32 [#allocation5], 4
          %s371 = int_to_ptr.vmem [resolvable:$true] %s370
          %376 = dma.hbm_to_vmem [thread:$0]  %s369, 1024, %s371, [#allocation6], 128, 128, 8
        $region32: #{vae_forward.1} parent=11 // pred_fallthru
          _
        // Predicated region
        $region33: #{vae_forward.1} parent=11 // pred_check
          %p377 = pneg %p205
        $region34: #{vae_forward.1} parent=11 // pred_check_branch
          %379 = sbr.rel (%p377) target = $region36
        $region35: #{vae_forward.1} parent=11 // pred_region
          _
        $region36: #{vae_forward.1} parent=11 // pred_fallthru
          _
        // Predicated region
        $region37: #{vae_forward.1} parent=11 // pred_check
          %p380 = pneg %p226
        $region38: #{vae_forward.1} parent=11 // pred_check_branch
          %382 = sbr.rel (%p380) target = $region40
        $region39: #{vae_forward.1} parent=11 // pred_region
          %384 = vsyncadd [#allocation6], 0
          %s385 = sshll.u32 %s8, 4
          %s386 = int_to_ptr.hbm [resolvable:$true] %s385
          %s387 = sshll.u32 [#allocation7], 4
          %s388 = int_to_ptr.vmem [resolvable:$true] %s387
          %393 = dma.hbm_to_vmem [thread:$0]  %s386, 2048, %s388, [#allocation6], 64, 64, 4
        $region40: #{vae_forward.1} parent=11 // pred_fallthru
          _
        // Predicated region
        $region41: #{vae_forward.1} parent=11 // pred_check
          %p394 = pneg %p247
        $region42: #{vae_forward.1} parent=11 // pred_check_branch
          %396 = sbr.rel (%p394) target = $region44
        $region43: #{vae_forward.1} parent=11 // pred_region
          _
        $region44: #{vae_forward.1} parent=11 // pred_fallthru
          _
      $region12: #{vae_forward.1} parent=5 // pred_fallthru
        _
      %p397 = scmp.lt.s32.totalorder %s27, 2
      // Predicated region
      $region45: #{vae_forward.1} parent=5 // pred_check
        %p398 = pneg %p397
      $region46: #{vae_forward.1} parent=5 // pred_check_branch
        %400 = sbr.rel (%p398) target = $region48
      $region47: #{vae_forward.1} parent=5 // pred_region
        // Predicated region
        $region49: #{vae_forward.1} parent=47 // pred_check
          %p401 = pneg %p47
        $region50: #{vae_forward.1} parent=47 // pred_check_branch
          %403 = sbr.rel (%p401) target = $region52
        $region51: #{vae_forward.1} parent=47 // pred_region
          %s404 = smul.u32 2, %s27
          %p405 = scmp.lt.s32.totalorder %s404, 3
          %s406 = scalar_select %p405, %s404, 3
          %s407 = smul.addr %s406, 4
          %s408 = scalar_lea.vmem %s0, %s407
          %s409 = smul.u32 2, %s27
        $region52: #{vae_forward.1} parent=47 // pred_fallthru
          _
        // Predicated region
        $region53: #{vae_forward.1} parent=47 // pred_check
          %p410 = pneg %p73
        $region54: #{vae_forward.1} parent=47 // pred_check_branch
          %412 = sbr.rel (%p410) target = $region56
        $region55: #{vae_forward.1} parent=47 // pred_region
          %s413 = smul.u32 2, %s27
          %p414 = scmp.lt.s32.totalorder %s413, 3
          %s415 = scalar_select %p414, %s413, 3
          %s416 = smul.addr %s415, 4
          %s417 = scalar_lea.vmem %s1, %s416
          %s418 = smul.u32 2, %s27
        $region56: #{vae_forward.1} parent=47 // pred_fallthru
          _
      $region48: #{vae_forward.1} parent=5 // pred_fallthru
        _
      %p419 = scmp.le.s32.totalorder 1, %s27
      %p420 = scmp.lt.s32.totalorder %s27, 3
      %p421 = pnand %p419, %p420
      %p422 = pneg %p421
      // Predicated region
      $region57: #{vae_forward.1} parent=5 // pred_check
        _
      $region58: #{vae_forward.1} parent=5 // pred_check_branch
        %424 = sbr.rel (%p421) target = $region60
      $region59: #{vae_forward.1} parent=5 // pred_region
        %s425 = ssub.s32 %s27, 1
        // Predicated region
        $region61: #{vae_forward.1} parent=59 // pred_check
          %p426 = pneg %p142
        $region62: #{vae_forward.1} parent=59 // pred_check_branch
          %428 = sbr.rel (%p426) target = $region64
        $region63: #{vae_forward.1} parent=59 // pred_region
          %430 = dma.done [#allocation3], 2048
        $region64: #{vae_forward.1} parent=59 // pred_fallthru
          _
        // Predicated region
        $region65: #{vae_forward.1} parent=59 // pred_check
          %p431 = pneg %p184
        $region66: #{vae_forward.1} parent=59 // pred_check_branch
          %433 = sbr.rel (%p431) target = $region68
        $region67: #{vae_forward.1} parent=59 // pred_region
          %435 = dma.done [#allocation6], 1024
        $region68: #{vae_forward.1} parent=59 // pred_fallthru
          _
        // Predicated region
        $region69: #{vae_forward.1} parent=59 // pred_check
          %p436 = pneg %p226
        $region70: #{vae_forward.1} parent=59 // pred_check_branch
          %438 = sbr.rel (%p436) target = $region72
        $region71: #{vae_forward.1} parent=59 // pred_region
          %440 = dma.done [#allocation6], 2048
        $region72: #{vae_forward.1} parent=59 // pred_fallthru
          _
        %s441 = smul.u32 2, %s32
        %p442 = scmp.lt.s32.totalorder %s441, 3
        %s443 = scalar_select %p442, %s441, 3
        %s444 = smul.addr %s443, 4
        %s445 = scalar_lea.vmem %s0, %s444
        %p446 = pneg %p53
        %p447 = pneg %p50
        %s448 = smul.u32 2, %s32
        %p449 = scmp.lt.s32.totalorder %s448, 3
        %s450 = scalar_select %p449, %s448, 3
        %s451 = smul.addr %s450, 4
        %s452 = scalar_lea.vmem %s1, %s451
        %p453 = pneg %p79
        %p454 = pneg %p76
        %p455 = pneg %p100
        %p456 = pneg %p97
        %p457 = pneg %p121
        %p458 = pneg %p118
        %p459 = pneg %p142
        %p460 = pneg %p139
        %p461 = pneg %p163
        %p462 = pneg %p160
        %p463 = pneg %p184
        %p464 = pneg %p181
        %p465 = pneg %p205
        %p466 = pneg %p202
        %p467 = pneg %p226
        %p468 = pneg %p223
        %p469 = pneg %p247
        %p470 = pneg %p244
        %p471 = pneg %p273
        %p472 = pneg %p270
        %s473 = sand.u32 %s260, 1
        %s474 = scalar_lea.sflag [#allocation4], %s473
        %s475 = sand.u32 %s260, 1
        %s476 = smul.addr %s475, 8
        %s477 = scalar_lea.vmem [#allocation8], %s476
        %p478 = pneg %p299
        %p479 = pneg %p296
        %s480 = smul.u32 2, %s32
        %p481 = scmp.lt.s32.totalorder %s480, 3
        %s482 = scalar_select %p481, %s480, 3
        %s483 = smul.addr %s482, 4
        %s484 = scalar_lea.vmem %s11, %s483
        %p485 = pneg %p325
        %p486 = pneg %p322
        %s487 = sand.u32 %s312, 1
        %s488 = scalar_lea.sflag [#allocation10], %s487
        %s489 = sand.u32 %s312, 1
        %s490 = smul.addr %s489, 8
        %s491 = scalar_lea.vmem [#allocation9], %s490
        %s492 = smul.u32 2, %s32
        %p493 = scmp.lt.s32.totalorder %s492, 3
        %s494 = scalar_select %p493, %s492, 3
        %s495 = smul.addr %s494, 4
        %s496 = scalar_lea.vmem %s0, %s495
        %s497 = smul.u32 2, %s32
        %s498 = smul.u32 2, %s32
        %p499 = scmp.lt.s32.totalorder %s498, 3
        %s500 = scalar_select %p499, %s498, 3
        %s501 = smul.addr %s500, 4
        %s502 = scalar_lea.vmem %s1, %s501
        %s503 = smul.u32 2, %s32
        %s504 = smul.u32 2, %s32
        %s505 = smul.u32 2, %s32
        %p506 = scmp.lt.s32.totalorder %s505, 3
        %s507 = scalar_select %p506, %s505, 3
        %s508 = smul.addr %s507, 4
        %s509 = scalar_lea.vmem %s11, %s508
        %s510 = smul.u32 2, %s32
        %s511 = smul.u32 2, %s32
        %v513 = vld [vmem:[%s496] sm:$0xf]
        %v514 = vld [vmem:[%s496 + $0x4] sm:$0xf]
        %v515 = vld [vmem:[%s2] sm:$0xff]
        %v516 = vld [vmem:[%s2 + $0x8] sm:$0xff]
        %v517 = vld [vmem:[%s2 + $0x10] sm:$0xff]
        %v518 = vld [vmem:[%s2 + $0x18] sm:$0xff]
        %v519 = vld [vmem:[%s2 + $0x20] sm:$0xff]
        %v520 = vld [vmem:[%s2 + $0x28] sm:$0xff]
        %v521 = vld [vmem:[%s2 + $0x30] sm:$0xff]
        %v522 = vld [vmem:[%s2 + $0x38] sm:$0xff]
        %v523 = vld [vmem:[%s2 + $0x40] sm:$0xff]
        %v524 = vld [vmem:[%s2 + $0x48] sm:$0xff]
        %v525 = vld [vmem:[%s2 + $0x50] sm:$0xff]
        %v526 = vld [vmem:[%s2 + $0x58] sm:$0xff]
        %v527 = vld [vmem:[%s2 + $0x60] sm:$0xff]
        %v528 = vld [vmem:[%s2 + $0x68] sm:$0xff]
        %v529 = vld [vmem:[%s2 + $0x70] sm:$0xff]
        %v530 = vld [vmem:[%s2 + $0x78] sm:$0xff]
        %v531 = vld [vmem:[%s3] sm:$0x3]
        %v533 = vperm.slane %v531, 0
        %v534 = vperm.slane %v531, 1
        %v539 = vunpack.c.l.b16 %v513
        %v540 = vunpack.c.l.b16 %v514
        %v541 = vpack.c.b16 %v540, %v539
        %v559 = vunpack.c.l.b16 %v515
        %v560 = vunpack.c.h.b16 %v515
        %v561 = vunpack.c.l.b16 %v516
        %v562 = vunpack.c.h.b16 %v516
        %v563 = vunpack.c.l.b16 %v517
        %v564 = vunpack.c.h.b16 %v517
        %v565 = vunpack.c.l.b16 %v518
        %v566 = vunpack.c.h.b16 %v518
        %v567 = vunpack.c.l.b16 %v519
        %v568 = vunpack.c.h.b16 %v519
        %v569 = vunpack.c.l.b16 %v520
        %v570 = vunpack.c.h.b16 %v520
        %v571 = vunpack.c.l.b16 %v521
        %v572 = vunpack.c.h.b16 %v521
        %v573 = vunpack.c.l.b16 %v522
        %v574 = vunpack.c.h.b16 %v522
        %v575 = vunpack.c.l.b16 %v523
        %v576 = vunpack.c.h.b16 %v523
        %v577 = vunpack.c.l.b16 %v524
        %v578 = vunpack.c.h.b16 %v524
        %v579 = vunpack.c.l.b16 %v525
        %v580 = vunpack.c.h.b16 %v525
        %v581 = vunpack.c.l.b16 %v526
        %v582 = vunpack.c.h.b16 %v526
        %v583 = vunpack.c.l.b16 %v527
        %v584 = vunpack.c.h.b16 %v527
        %v585 = vunpack.c.l.b16 %v528
        %v586 = vunpack.c.h.b16 %v528
        %v587 = vunpack.c.l.b16 %v529
        %v588 = vunpack.c.h.b16 %v529
        %v589 = vunpack.c.l.b16 %v530
        %v590 = vunpack.c.h.b16 %v530
        %v591 = vpack.c.b16 %v561, %v559
        %v592 = vpack.c.b16 %v562, %v560
        %v593 = vpack.c.b16 %v565, %v563
        %v594 = vpack.c.b16 %v566, %v564
        %v595 = vpack.c.b16 %v569, %v567
        %v596 = vpack.c.b16 %v570, %v568
        %v597 = vpack.c.b16 %v573, %v571
        %v598 = vpack.c.b16 %v574, %v572
        %v599 = vpack.c.b16 %v577, %v575
        %v600 = vpack.c.b16 %v578, %v576
        %v601 = vpack.c.b16 %v581, %v579
        %v602 = vpack.c.b16 %v582, %v580
        %v603 = vpack.c.b16 %v585, %v583
        %v604 = vpack.c.b16 %v586, %v584
        %v605 = vpack.c.b16 %v589, %v587
        %v606 = vpack.c.b16 %v590, %v588
        %623 = vmatpush.bf16.msra.mxu0 %v605
        %624 = vmatpush.bf16.msra.mxu0 %v603
        %625 = vmatpush.bf16.msra.mxu0 %v601
        %626 = vmatpush.bf16.msra.mxu0 %v599
        %627 = vmatpush.bf16.msra.mxu0 %v597
        %628 = vmatpush.bf16.msra.mxu0 %v595
        %629 = vmatpush.bf16.msra.mxu0 %v593
        %630 = vmatpush.bf16.msra.mxu0 %v591
        %631 = vmatmul.bf16.gmra.mxu0 %v541
        %v632 = vpop.f32.mrf.mxu0
        %v633 = vadd.f32 %v533, %v632
        %v634 = vpop.f32.mrf.mxu0
        %v635 = vadd.f32 %v533, %v634
        %636 = vdwg.mxu0
        %637 = vmatpush.bf16.msra.mxu0 %v606
        %638 = vmatpush.bf16.msra.mxu0 %v604
        %639 = vmatpush.bf16.msra.mxu0 %v602
        %640 = vmatpush.bf16.msra.mxu0 %v600
        %641 = vmatpush.bf16.msra.mxu0 %v598
        %642 = vmatpush.bf16.msra.mxu0 %v596
        %643 = vmatpush.bf16.msra.mxu0 %v594
        %644 = vmatpush.bf16.msra.mxu0 %v592
        %645 = vmatmul.bf16.gmra.mxu0 %v541
        %v646 = vpop.f32.mrf.mxu0
        %v647 = vadd.f32 %v534, %v646
        %v648 = vpop.f32.mrf.mxu0
        %v649 = vadd.f32 %v534, %v648
        %650 = vdwg.mxu0
        %v651 = vmax.f32 %v633, 0.0
        %v652 = vmax.f32 %v647, 0.0
        %v653 = vmax.f32 %v635, 0.0
        %v654 = vmax.f32 %v649, 0.0
        %v655 = vpack.c.bf16 %v653, %v651
        %v656 = vpack.c.bf16 %v654, %v652
        %v657 = vld [vmem:[#allocation2] sm:$0xf]
        %v658 = vld [vmem:[#allocation2 + $0x4] sm:$0xf]
        %v659 = vld [vmem:[#allocation2 + $0x8] sm:$0xf]
        %v660 = vld [vmem:[#allocation2 + $0xc] sm:$0xf]
        %v661 = vld [vmem:[#allocation2 + $0x10] sm:$0xf]
        %v662 = vld [vmem:[#allocation2 + $0x14] sm:$0xf]
        %v663 = vld [vmem:[#allocation2 + $0x18] sm:$0xf]
        %v664 = vld [vmem:[#allocation2 + $0x1c] sm:$0xf]
        %v665 = vld [vmem:[#allocation2 + $0x20] sm:$0xf]
        %v666 = vld [vmem:[#allocation2 + $0x24] sm:$0xf]
        %v667 = vld [vmem:[#allocation2 + $0x28] sm:$0xf]
        %v668 = vld [vmem:[#allocation2 + $0x2c] sm:$0xf]
        %v669 = vld [vmem:[#allocation2 + $0x30] sm:$0xf]
        %v670 = vld [vmem:[#allocation2 + $0x34] sm:$0xf]
        %v671 = vld [vmem:[#allocation2 + $0x38] sm:$0xf]
        %v672 = vld [vmem:[#allocation2 + $0x3c] sm:$0xf]
        %v673 = vld [vmem:[#allocation2 + $0x40] sm:$0xf]
        %v674 = vld [vmem:[#allocation2 + $0x44] sm:$0xf]
        %v675 = vld [vmem:[#allocation2 + $0x48] sm:$0xf]
        %v676 = vld [vmem:[#allocation2 + $0x4c] sm:$0xf]
        %v677 = vld [vmem:[#allocation2 + $0x50] sm:$0xf]
        %v678 = vld [vmem:[#allocation2 + $0x54] sm:$0xf]
        %v679 = vld [vmem:[#allocation2 + $0x58] sm:$0xf]
        %v680 = vld [vmem:[#allocation2 + $0x5c] sm:$0xf]
        %v681 = vld [vmem:[#allocation2 + $0x60] sm:$0xf]
        %v682 = vld [vmem:[#allocation2 + $0x64] sm:$0xf]
        %v683 = vld [vmem:[#allocation2 + $0x68] sm:$0xf]
        %v684 = vld [vmem:[#allocation2 + $0x6c] sm:$0xf]
        %v685 = vld [vmem:[#allocation2 + $0x70] sm:$0xf]
        %v686 = vld [vmem:[#allocation2 + $0x74] sm:$0xf]
        %v687 = vld [vmem:[#allocation2 + $0x78] sm:$0xf]
        %v688 = vld [vmem:[#allocation2 + $0x7c] sm:$0xf]
        %v689 = vld [vmem:[%s5] sm:$0x1]
        %v691 = vperm.slane %v689, 0
        %v725 = vunpack.c.l.b16 %v657
        %v726 = vunpack.c.l.b16 %v658
        %v727 = vunpack.c.l.b16 %v659
        %v728 = vunpack.c.l.b16 %v660
        %v729 = vunpack.c.l.b16 %v661
        %v730 = vunpack.c.l.b16 %v662
        %v731 = vunpack.c.l.b16 %v663
        %v732 = vunpack.c.l.b16 %v664
        %v733 = vunpack.c.l.b16 %v665
        %v734 = vunpack.c.l.b16 %v666
        %v735 = vunpack.c.l.b16 %v667
        %v736 = vunpack.c.l.b16 %v668
        %v737 = vunpack.c.l.b16 %v669
        %v738 = vunpack.c.l.b16 %v670
        %v739 = vunpack.c.l.b16 %v671
        %v740 = vunpack.c.l.b16 %v672
        %v741 = vunpack.c.l.b16 %v673
        %v742 = vunpack.c.l.b16 %v674
        %v743 = vunpack.c.l.b16 %v675
        %v744 = vunpack.c.l.b16 %v676
        %v745 = vunpack.c.l.b16 %v677
        %v746 = vunpack.c.l.b16 %v678
        %v747 = vunpack.c.l.b16 %v679
        %v748 = vunpack.c.l.b16 %v680
        %v749 = vunpack.c.l.b16 %v681
        %v750 = vunpack.c.l.b16 %v682
        %v751 = vunpack.c.l.b16 %v683
        %v752 = vunpack.c.l.b16 %v684
        %v753 = vunpack.c.l.b16 %v685
        %v754 = vunpack.c.l.b16 %v686
        %v755 = vunpack.c.l.b16 %v687
        %v756 = vunpack.c.l.b16 %v688
        %v757 = vpack.c.b16 %v726, %v725
        %v758 = vpack.c.b16 %v728, %v727
        %v759 = vpack.c.b16 %v730, %v729
        %v760 = vpack.c.b16 %v732, %v731
        %v761 = vpack.c.b16 %v734, %v733
        %v762 = vpack.c.b16 %v736, %v735
        %v763 = vpack.c.b16 %v738, %v737
        %v764 = vpack.c.b16 %v740, %v739
        %v765 = vpack.c.b16 %v742, %v741
        %v766 = vpack.c.b16 %v744, %v743
        %v767 = vpack.c.b16 %v746, %v745
        %v768 = vpack.c.b16 %v748, %v747
        %v769 = vpack.c.b16 %v750, %v749
        %v770 = vpack.c.b16 %v752, %v751
        %v771 = vpack.c.b16 %v754, %v753
        %v772 = vpack.c.b16 %v756, %v755
        %789 = vmatpush.bf16.msra.mxu0 %v764
        %790 = vmatpush.bf16.msra.mxu0 %v763
        %791 = vmatpush.bf16.msra.mxu0 %v762
        %792 = vmatpush.bf16.msra.mxu0 %v761
        %793 = vmatpush.bf16.msra.mxu0 %v760
        %794 = vmatpush.bf16.msra.mxu0 %v759
        %795 = vmatpush.bf16.msra.mxu0 %v758
        %796 = vmatpush.bf16.msra.mxu0 %v757
        %797 = vmatmul.bf16.gmra.mxu0 %v655
        %v798 = vpop.f32.mrf.mxu0
        %v799 = vadd.f32 %v691, %v798
        %v800 = vpop.f32.mrf.mxu0
        %v801 = vadd.f32 %v691, %v800
        %802 = vdwg.mxu0
        %803 = vmatpush.bf16.msra.mxu0 %v772
        %804 = vmatpush.bf16.msra.mxu0 %v771
        %805 = vmatpush.bf16.msra.mxu0 %v770
        %806 = vmatpush.bf16.msra.mxu0 %v769
        %807 = vmatpush.bf16.msra.mxu0 %v768
        %808 = vmatpush.bf16.msra.mxu0 %v767
        %809 = vmatpush.bf16.msra.mxu0 %v766
        %810 = vmatpush.bf16.msra.mxu0 %v765
        %811 = vmatmul.bf16.gmra.mxu0 %v656
        %v812 = vpop.f32.mrf.mxu0
        %v813 = vadd.f32 %v799, %v812
        %v814 = vpop.f32.mrf.mxu0
        %v815 = vadd.f32 %v801, %v814
        %816 = vdwg.mxu0
        %v817 = vld [vmem:[%s502] sm:$0xf]
        %v818 = vld [vmem:[%s502 + $0x4] sm:$0xf]
        %v819 = vunpack.c.l.bf16 %v817
        %v820 = vunpack.c.l.bf16 %v818
        %v821 = vmul.f32 %v813, 0.5
        %v822 = vmul.f32 %v815, 0.5
        %v823 = vmul.f32 %v821, 1.442695
        %v824 = vpow.pop %v823
        %v825 = vmul.f32 %v822, 1.442695
        %v826 = vpow.pop %v825
        %829 = vrot.lane.b32.xlu0 %v824, 64
        %v830 = vpop.permute.xlu0 %829
        %831 = vrot.lane.b32.xlu0 %v826, 64
        %v832 = vpop.permute.xlu0 %831
        %v835 = vmul.f32 %v819, %v830
        %v836 = vmul.f32 %v820, %v832
        %v837 = vadd.f32 %v813, %v835
        %v838 = vadd.f32 %v815, %v836
        %v839 = vpack.c.bf16 %v837, %v837
        %v840 = vpack.c.bf16 %v838, %v838
        %v841 = vld [vmem:[#allocation5] sm:$0xff]
        %v842 = vld [vmem:[#allocation5 + $0x8] sm:$0xff]
        %v843 = vld [vmem:[#allocation5 + $0x10] sm:$0xff]
        %v844 = vld [vmem:[#allocation5 + $0x18] sm:$0xff]
        %v845 = vld [vmem:[#allocation5 + $0x20] sm:$0xff]
        %v846 = vld [vmem:[#allocation5 + $0x28] sm:$0xff]
        %v847 = vld [vmem:[#allocation5 + $0x30] sm:$0xff]
        %v848 = vld [vmem:[#allocation5 + $0x38] sm:$0xff]
        %v849 = vld [vmem:[%s7] sm:$0x3]
        %v851 = vperm.slane %v849, 0
        %v852 = vperm.slane %v849, 1
        %v857 = vunpack.c.l.b16 %v839
        %v858 = vunpack.c.l.b16 %v840
        %v859 = vpack.c.b16 %v858, %v857
        %v868 = vunpack.c.l.b16 %v841
        %v869 = vunpack.c.h.b16 %v841
        %v870 = vunpack.c.l.b16 %v842
        %v871 = vunpack.c.h.b16 %v842
        %v872 = vunpack.c.l.b16 %v843
        %v873 = vunpack.c.h.b16 %v843
        %v874 = vunpack.c.l.b16 %v844
        %v875 = vunpack.c.h.b16 %v844
        %v876 = vunpack.c.l.b16 %v845
        %v877 = vunpack.c.h.b16 %v845
        %v878 = vunpack.c.l.b16 %v846
        %v879 = vunpack.c.h.b16 %v846
        %v880 = vunpack.c.l.b16 %v847
        %v881 = vunpack.c.h.b16 %v847
        %v882 = vunpack.c.l.b16 %v848
        %v883 = vunpack.c.h.b16 %v848
        %v884 = vpack.c.b16 %v870, %v868
        %v885 = vpack.c.b16 %v871, %v869
        %v886 = vpack.c.b16 %v874, %v872
        %v887 = vpack.c.b16 %v875, %v873
        %v888 = vpack.c.b16 %v878, %v876
        %v889 = vpack.c.b16 %v879, %v877
        %v890 = vpack.c.b16 %v882, %v880
        %v891 = vpack.c.b16 %v883, %v881
        %vm900 = vcmask 523264
        %v902 = vsel %vm900, %v859, 0
        %904 = vmatpush.bf16.msra.mxu0 0
        %905 = vmatpush.bf16.msra.mxu0 0
        %906 = vmatpush.bf16.msra.mxu0 0
        %907 = vmatpush.bf16.msra.mxu0 0
        %908 = vmatpush.bf16.msra.mxu0 %v890
        %909 = vmatpush.bf16.msra.mxu0 %v888
        %910 = vmatpush.bf16.msra.mxu0 %v886
        %911 = vmatpush.bf16.msra.mxu0 %v884
        %912 = vmatmul.bf16.gmra.mxu0 %v902
        %v913 = vpop.f32.mrf.mxu0
        %v914 = vadd.f32 %v851, %v913
        %v915 = vpop.f32.mrf.mxu0
        %v916 = vadd.f32 %v851, %v915
        %917 = vdwg.mxu0
        %918 = vmatpush.bf16.msra.mxu0 0
        %919 = vmatpush.bf16.msra.mxu0 0
        %920 = vmatpush.bf16.msra.mxu0 0
        %921 = vmatpush.bf16.msra.mxu0 0
        %922 = vmatpush.bf16.msra.mxu0 %v891
        %923 = vmatpush.bf16.msra.mxu0 %v889
        %924 = vmatpush.bf16.msra.mxu0 %v887
        %925 = vmatpush.bf16.msra.mxu0 %v885
        %926 = vmatmul.bf16.gmra.mxu0 %v902
        %v927 = vpop.f32.mrf.mxu0
        %v928 = vadd.f32 %v852, %v927
        %v929 = vpop.f32.mrf.mxu0
        %v930 = vadd.f32 %v852, %v929
        %931 = vdwg.mxu0
        %v932 = vmax.f32 %v914, 0.0
        %v933 = vmax.f32 %v928, 0.0
        %v934 = vmax.f32 %v916, 0.0
        %v935 = vmax.f32 %v930, 0.0
        %v936 = vpack.c.bf16 %v934, %v932
        %v937 = vpack.c.bf16 %v935, %v933
        %v938 = vld [vmem:[#allocation7] sm:$0xf]
        %v939 = vld [vmem:[#allocation7 + $0x4] sm:$0xf]
        %v940 = vld [vmem:[#allocation7 + $0x8] sm:$0xf]
        %v941 = vld [vmem:[#allocation7 + $0xc] sm:$0xf]
        %v942 = vld [vmem:[#allocation7 + $0x10] sm:$0xf]
        %v943 = vld [vmem:[#allocation7 + $0x14] sm:$0xf]
        %v944 = vld [vmem:[#allocation7 + $0x18] sm:$0xf]
        %v945 = vld [vmem:[#allocation7 + $0x1c] sm:$0xf]
        %v946 = vld [vmem:[#allocation7 + $0x20] sm:$0xf]
        %v947 = vld [vmem:[#allocation7 + $0x24] sm:$0xf]
        %v948 = vld [vmem:[#allocation7 + $0x28] sm:$0xf]
        %v949 = vld [vmem:[#allocation7 + $0x2c] sm:$0xf]
        %v950 = vld [vmem:[#allocation7 + $0x30] sm:$0xf]
        %v951 = vld [vmem:[#allocation7 + $0x34] sm:$0xf]
        %v952 = vld [vmem:[#allocation7 + $0x38] sm:$0xf]
        %v953 = vld [vmem:[#allocation7 + $0x3c] sm:$0xf]
        %v954 = vld [vmem:[#allocation7 + $0x40] sm:$0xf]
        %v955 = vld [vmem:[#allocation7 + $0x44] sm:$0xf]
        %v956 = vld [vmem:[#allocation7 + $0x48] sm:$0xf]
        %v957 = vld [vmem:[#allocation7 + $0x4c] sm:$0xf]
        %v958 = vld [vmem:[#allocation7 + $0x50] sm:$0xf]
        %v959 = vld [vmem:[#allocation7 + $0x54] sm:$0xf]
        %v960 = vld [vmem:[#allocation7 + $0x58] sm:$0xf]
        %v961 = vld [vmem:[#allocation7 + $0x5c] sm:$0xf]
        %v962 = vld [vmem:[#allocation7 + $0x60] sm:$0xf]
        %v963 = vld [vmem:[#allocation7 + $0x64] sm:$0xf]
        %v964 = vld [vmem:[#allocation7 + $0x68] sm:$0xf]
        %v965 = vld [vmem:[#allocation7 + $0x6c] sm:$0xf]
        %v966 = vld [vmem:[#allocation7 + $0x70] sm:$0xf]
        %v967 = vld [vmem:[#allocation7 + $0x74] sm:$0xf]
        %v968 = vld [vmem:[#allocation7 + $0x78] sm:$0xf]
        %v969 = vld [vmem:[#allocation7 + $0x7c] sm:$0xf]
        %v970 = vld [vmem:[%s9] sm:$0x1]
        %v972 = vperm.slane %v970, 0
        %v1006 = vunpack.c.l.b16 %v938
        %v1007 = vunpack.c.l.b16 %v939
        %v1008 = vunpack.c.l.b16 %v940
        %v1009 = vunpack.c.l.b16 %v941
        %v1010 = vunpack.c.l.b16 %v942
        %v1011 = vunpack.c.l.b16 %v943
        %v1012 = vunpack.c.l.b16 %v944
        %v1013 = vunpack.c.l.b16 %v945
        %v1014 = vunpack.c.l.b16 %v946
        %v1015 = vunpack.c.l.b16 %v947
        %v1016 = vunpack.c.l.b16 %v948
        %v1017 = vunpack.c.l.b16 %v949
        %v1018 = vunpack.c.l.b16 %v950
        %v1019 = vunpack.c.l.b16 %v951
        %v1020 = vunpack.c.l.b16 %v952
        %v1021 = vunpack.c.l.b16 %v953
        %v1022 = vunpack.c.l.b16 %v954
        %v1023 = vunpack.c.l.b16 %v955
        %v1024 = vunpack.c.l.b16 %v956
        %v1025 = vunpack.c.l.b16 %v957
        %v1026 = vunpack.c.l.b16 %v958
        %v1027 = vunpack.c.l.b16 %v959
        %v1028 = vunpack.c.l.b16 %v960
        %v1029 = vunpack.c.l.b16 %v961
        %v1030 = vunpack.c.l.b16 %v962
        %v1031 = vunpack.c.l.b16 %v963
        %v1032 = vunpack.c.l.b16 %v964
        %v1033 = vunpack.c.l.b16 %v965
        %v1034 = vunpack.c.l.b16 %v966
        %v1035 = vunpack.c.l.b16 %v967
        %v1036 = vunpack.c.l.b16 %v968
        %v1037 = vunpack.c.l.b16 %v969
        %v1038 = vpack.c.b16 %v1007, %v1006
        %v1039 = vpack.c.b16 %v1009, %v1008
        %v1040 = vpack.c.b16 %v1011, %v1010
        %v1041 = vpack.c.b16 %v1013, %v1012
        %v1042 = vpack.c.b16 %v1015, %v1014
        %v1043 = vpack.c.b16 %v1017, %v1016
        %v1044 = vpack.c.b16 %v1019, %v1018
        %v1045 = vpack.c.b16 %v1021, %v1020
        %v1046 = vpack.c.b16 %v1023, %v1022
        %v1047 = vpack.c.b16 %v1025, %v1024
        %v1048 = vpack.c.b16 %v1027, %v1026
        %v1049 = vpack.c.b16 %v1029, %v1028
        %v1050 = vpack.c.b16 %v1031, %v1030
        %v1051 = vpack.c.b16 %v1033, %v1032
        %v1052 = vpack.c.b16 %v1035, %v1034
        %v1053 = vpack.c.b16 %v1037, %v1036
        %1070 = vmatpush.bf16.msra.mxu0 %v1045
        %1071 = vmatpush.bf16.msra.mxu0 %v1044
        %1072 = vmatpush.bf16.msra.mxu0 %v1043
        %1073 = vmatpush.bf16.msra.mxu0 %v1042
        %1074 = vmatpush.bf16.msra.mxu0 %v1041
        %1075 = vmatpush.bf16.msra.mxu0 %v1040
        %1076 = vmatpush.bf16.msra.mxu0 %v1039
        %1077 = vmatpush.bf16.msra.mxu0 %v1038
        %1078 = vmatmul.bf16.gmra.mxu0 %v936
        %v1079 = vpop.f32.mrf.mxu0
        %v1080 = vadd.f32 %v972, %v1079
        %v1081 = vpop.f32.mrf.mxu0
        %v1082 = vadd.f32 %v972, %v1081
        %1083 = vdwg.mxu0
        %1084 = vmatpush.bf16.msra.mxu0 %v1053
        %1085 = vmatpush.bf16.msra.mxu0 %v1052
        %1086 = vmatpush.bf16.msra.mxu0 %v1051
        %1087 = vmatpush.bf16.msra.mxu0 %v1050
        %1088 = vmatpush.bf16.msra.mxu0 %v1049
        %1089 = vmatpush.bf16.msra.mxu0 %v1048
        %1090 = vmatpush.bf16.msra.mxu0 %v1047
        %1091 = vmatpush.bf16.msra.mxu0 %v1046
        %1092 = vmatmul.bf16.gmra.mxu0 %v937
        %v1093 = vpop.f32.mrf.mxu0
        %v1094 = vadd.f32 %v1080, %v1093
        %v1095 = vpop.f32.mrf.mxu0
        %v1096 = vadd.f32 %v1082, %v1095
        %1097 = vdwg.mxu0
        %v1098 = vsub.f32 0.0, %v1094
        %v1099 = vsub.f32 0.0, %v1096
        %v1100 = vmul.f32 %v1098, 1.442695
        %v1101 = vpow.pop %v1100
        %v1102 = vmul.f32 %v1099, 1.442695
        %v1103 = vpow.pop %v1102
        %v1104 = vadd.f32 %v1101, 1.0
        %v1105 = vadd.f32 %v1103, 1.0
        %v1106 = vrcp.pop %v1104
        %v1107 = vrcp.pop %v1105
        %v1108 = vpack.c.bf16 %v1106, %v1106
        %v1109 = vpack.c.bf16 %v1107, %v1107
        %1110 = vst [vmem:[%s477] sm:$0xf] %v1108
        %1111 = vst [vmem:[%s477 + $0x4] sm:$0xf] %v1109
        %v1112 = vpack.c.bf16 %v813, %v813
        %v1113 = vpack.c.bf16 %v815, %v815
        %1114 = vst [vmem:[%s509] sm:$0xf] %v1112
        %1115 = vst [vmem:[%s509 + $0x4] sm:$0xf] %v1113
        %vm1116 = vcmask 519168
        %1117 = vst.msk [vmem:[%s491] sm:$0xf] %vm1116, %v839
        %1118 = vst.msk [vmem:[%s491 + $0x4] sm:$0xf] %vm1116, %v840
        %s1119 = sand.u32 %s260, 1
        %s1120 = scalar_lea.sflag [#allocation4], %s1119
        %s1121 = sand.u32 %s260, 1
        %s1122 = smul.addr %s1121, 8
        %s1123 = scalar_lea.vmem [#allocation8], %s1122
        %s1124 = smul.u32 2, %s32
        %p1125 = scmp.lt.s32.totalorder %s1124, 3
        %s1126 = scalar_select %p1125, %s1124, 3
        %s1127 = smul.addr %s1126, 4
        %s1128 = scalar_lea.vmem %s11, %s1127
        %s1129 = sand.u32 %s312, 1
        %s1130 = scalar_lea.sflag [#allocation10], %s1129
        %s1131 = sand.u32 %s312, 1
        %s1132 = smul.addr %s1131, 8
        %s1133 = scalar_lea.vmem [#allocation9], %s1132
        // Predicated region
        $region73: #{vae_forward.1} parent=59 // pred_check
          %p1134 = pneg %p270
        $region74: #{vae_forward.1} parent=59 // pred_check_branch
          %1136 = sbr.rel (%p1134) target = $region76
        $region75: #{vae_forward.1} parent=59 // pred_region
          %s1137 = smul.u32 2, %s32
          %1139 = vsyncadd %s1120, 0
          %s1140 = smul.addr %s1137, 4
          %s1141 = scalar_lea.hbm %s10, %s1140
          %s1142 = sshll.u32 %s1123, 4
          %s1143 = int_to_ptr.vmem [resolvable:$true] %s1142
          %s1144 = sshll.u32 %s1141, 4
          %s1145 = int_to_ptr.hbm [resolvable:$true] %s1144
          %1150 = dma.vmem_to_hbm [thread:$0]  %s1143, 128, %s1145, %s1120, 64, 64, 4
        $region76: #{vae_forward.1} parent=59 // pred_fallthru
          _
        // Predicated region
        $region77: #{vae_forward.1} parent=59 // pred_check
          %p1151 = pneg %p296
        $region78: #{vae_forward.1} parent=59 // pred_check_branch
          %1153 = sbr.rel (%p1151) target = $region80
        $region79: #{vae_forward.1} parent=59 // pred_region
          %s1154 = smul.u32 2, %s32
        $region80: #{vae_forward.1} parent=59 // pred_fallthru
          _
        // Predicated region
        $region81: #{vae_forward.1} parent=59 // pred_check
          %p1155 = pneg %p322
        $region82: #{vae_forward.1} parent=59 // pred_check_branch
          %1157 = sbr.rel (%p1155) target = $region84
        $region83: #{vae_forward.1} parent=59 // pred_region
          %s1158 = smul.u32 2, %s32
          %1160 = vsyncadd %s1130, 0
          %s1161 = smul.addr %s1158, 4
          %s1162 = scalar_lea.hbm %s12, %s1161
          %s1163 = sshll.u32 %s1133, 4
          %s1164 = int_to_ptr.vmem [resolvable:$true] %s1163
          %s1165 = sshll.u32 %s1162, 4
          %s1166 = int_to_ptr.hbm [resolvable:$true] %s1165
          %1171 = dma.vmem_to_hbm [thread:$0]  %s1164, 128, %s1166, %s1130, 64, 64, 4
        $region84: #{vae_forward.1} parent=59 // pred_fallthru
          _
      $region60: #{vae_forward.1} parent=5 // pred_fallthru
        _
      %p1172 = scmp.le.s32.totalorder 2, %s27
      // Predicated region
      $region85: #{vae_forward.1} parent=5 // pred_check
        %p1173 = pneg %p1172
      $region86: #{vae_forward.1} parent=5 // pred_check_branch
        %1175 = sbr.rel (%p1173) target = $region88
      $region87: #{vae_forward.1} parent=5 // pred_region
        %s1176 = ssub.s32 %s27, 2
        // Predicated region
        $region89: #{vae_forward.1} parent=87 // pred_check
          %p1177 = pneg %p276
        $region90: #{vae_forward.1} parent=87 // pred_check_branch
          %1179 = sbr.rel (%p1177) target = $region92
        $region91: #{vae_forward.1} parent=87 // pred_region
          %s1180 = sand.u32 %s261, 1
          %s1181 = scalar_lea.sflag [#allocation4], %s1180
          %s1182 = sand.u32 %s261, 1
          %s1183 = smul.addr %s1182, 8
          %s1184 = scalar_lea.vmem [#allocation8], %s1183
          %1186 = dma.done %s1181, 128
        $region92: #{vae_forward.1} parent=87 // pred_fallthru
          _
        // Predicated region
        $region93: #{vae_forward.1} parent=87 // pred_check
          %p1187 = pneg %p302
        $region94: #{vae_forward.1} parent=87 // pred_check_branch
          %1189 = sbr.rel (%p1187) target = $region96
        $region95: #{vae_forward.1} parent=87 // pred_region
          %s1190 = smul.u32 2, %s33
          %p1191 = scmp.lt.s32.totalorder %s1190, 3
          %s1192 = scalar_select %p1191, %s1190, 3
          %s1193 = smul.addr %s1192, 4
          %s1194 = scalar_lea.vmem %s11, %s1193
        $region96: #{vae_forward.1} parent=87 // pred_fallthru
          _
        // Predicated region
        $region97: #{vae_forward.1} parent=87 // pred_check
          %p1195 = pneg %p328
        $region98: #{vae_forward.1} parent=87 // pred_check_branch
          %1197 = sbr.rel (%p1195) target = $region100
        $region99: #{vae_forward.1} parent=87 // pred_region
          %s1198 = sand.u32 %s313, 1
          %s1199 = scalar_lea.sflag [#allocation10], %s1198
          %s1200 = sand.u32 %s313, 1
          %s1201 = smul.addr %s1200, 8
          %s1202 = scalar_lea.vmem [#allocation9], %s1201
          %1204 = dma.done %s1199, 128
        $region100: #{vae_forward.1} parent=87 // pred_fallthru
          _
      $region88: #{vae_forward.1} parent=5 // pred_fallthru
        _
    $region6: #{vae_forward.1} parent=1 // loop_footer
      %s31 = sadd.s32 1, %s27
    $region7: #{vae_forward.1} parent=1 // loop_footer_branch
      %26 = sbr.rel target = $region3
    $region8: #{vae_forward.1} parent=1 // loop_exit
      _
    %1205 = vsyncpa [#allocation3], 1
    %s1206 = scalar_lea.sflag [#allocation3], 1
    %1207 = vsyncpa %s1206, 1
    %1208 = vsyncpa [#allocation6], 1
    %1209 = vsyncpa [#allocation4], 1
    %s1210 = scalar_lea.sflag [#allocation4], 1
    %1211 = vsyncpa %s1210, 1
    %1212 = vsyncpa [#allocation10], 1
    %s1213 = scalar_lea.sflag [#allocation10], 1
    %1214 = vsyncpa %s1213, 1

</llo_original>
